<compile_context>
chip_gen: v6e
topology: v6e:2x2x1
jax: 0.10.0
libtpu: 0.0.40
codegen_flags: <defaults>
</compile_context>

<pallas_src>
import jax
import jax.numpy as jnp
from jax.experimental import pallas as pl
from jax.experimental.pallas import tpu as pltpu

ENCODING_SIZE = 3
NUM_FEATURES = 5
SEQ_LENGTH = 6
INPUT_SIZE = NUM_FEATURES * SEQ_LENGTH      # 30
H1 = 64
H2 = 32
OUT_PAD = 128                               # lane-dense padded output width


def _round_up(n, m):
    return ((n + m - 1) // m) * m


def autoencoder_kernel(x_ref,
                       w1_ref, w2_ref, w34_ref, w5_ref, w6_ref,
                       b_ref,
                       out_ref):
    bias = b_ref[...]                                   # (8, 128) f32: one layer per row
    dt = w1_ref.dtype                                   # bf16 on the fast path, f32 otherwise

    # encoder L1: 30 -> 64, ReLU   (dot operands in weight dtype, f32 accumulate)
    x = x_ref[...].astype(dt)
    h = jnp.dot(x, w1_ref[...], preferred_element_type=jnp.float32) + bias[0:1, :H1]
    h = jnp.maximum(h, 0.0)
    # encoder L2: 64 -> 32, ReLU
    h = jnp.dot(h.astype(dt), w2_ref[...], preferred_element_type=jnp.float32) + bias[1:2, :H2]
    h = jnp.maximum(h, 0.0)
    # fused bottleneck (32 -> 3 -> 32, no activation in between): W34 = W3 @ W4
    h = jnp.dot(h.astype(dt), w34_ref[...], preferred_element_type=jnp.float32) + bias[2:3, :H2]
    h = jnp.maximum(h, 0.0)                             # ReLU that followed decoder L1
    # decoder L2: 32 -> 64, ReLU
    h = jnp.dot(h.astype(dt), w5_ref[...], preferred_element_type=jnp.float32) + bias[3:4, :H1]
    h = jnp.maximum(h, 0.0)
    # decoder L3: 64 -> 30 (zero-padded to 128 lanes -> unmasked store), no activation
    y = jnp.dot(h.astype(dt), w6_ref[...], preferred_element_type=jnp.float32) + bias[4:5, :]

    out_ref[...] = y.astype(out_ref.dtype)


def pack_params(params, dtype=jnp.bfloat16):
    """Fuse the bottleneck, pad the final layer to 128 lanes, pack biases into (8,128).

    dtype: MXU operand dtype for the weights (bf16 default, native on v5e/v6e/v7x MXUs;
    accumulation stays f32). Pass jnp.float32 for a full-precision path.
    """
    (w1, b1), (w2, b2), (w3, b3), (w4, b4), (w5, b5), (w6, b6) = params

    # Fusion done in f32 before the cast.
    w34 = w3 @ w4                       # (H2, H2)
    b34 = b3 @ w4 + b4                  # (1, H2)

    w6p = jnp.zeros((H1, OUT_PAD), jnp.float32).at[:, :INPUT_SIZE].set(w6)
    b6p = jnp.zeros((OUT_PAD,), jnp.float32).at[:INPUT_SIZE].set(b6[0])

    bias = jnp.zeros((8, OUT_PAD), jnp.float32)
    bias = bias.at[0, :H1].set(b1[0])
    bias = bias.at[1, :H2].set(b2[0])
    bias = bias.at[2, :H2].set(b34[0])
    bias = bias.at[3, :H1].set(b5[0])
    bias = bias.at[4, :].set(b6p)

    weights = tuple(w.astype(dtype) for w in (w1, w2, w34, w5, w6p))
    return weights + (bias.astype(jnp.float32),)        # biases stay f32 (VPU path)


def _resident_spec(shape, single_buffer):
    """Full-array block, same block index every grid step -> fetched once, VMEM-resident."""
    if single_buffer and hasattr(pl, "Buffered"):
        return pl.BlockSpec(shape, lambda i: (0, 0), pipeline_mode=pl.Buffered(1))
    return pl.BlockSpec(shape, lambda i: (0, 0))


def _dimension_semantics(grid0):
    """CORE_PARALLEL on v7x (2 TCs/chip) when the grid can actually be split; else 'parallel'."""
    if grid0 >= 2 and grid0 % 2 == 0 and hasattr(pltpu, "CORE_PARALLEL"):
        try:
            kind = jax.devices()[0].device_kind.lower()
        except Exception:
            kind = ""
        if ("v7" in kind) or ("tpu7" in kind):
            return (pltpu.CORE_PARALLEL,)
    return ("parallel",)


def autoencoder_forward(x, packed, *, tile_b=2048):
    """x: (B, INPUT_SIZE) float32. packed: output of pack_params()."""
    w1, w2, w34, w5, w6p, bias = packed

    batch = x.shape[0]
    rows = _round_up(batch, 8)
    if rows != batch:
        # Tiny pad (< 8 rows) only when batch isn't 8-aligned. Large 8-aligned batches are
        # never copied: the ragged last batch tile is masked by Pallas instead.
        x = jnp.pad(x, ((0, rows - batch), (0, 0)))

    tile = max(8, (int(tile_b) // 8) * 8)               # multiple of 8
    tile = min(tile, rows)
    grid0 = pl.cdiv(rows, tile)

    weight_bytes = sum(int(a.size) * a.dtype.itemsize for a in (w1, w2, w34, w5, w6p, bias))
    cost = pl.CostEstimate(
        flops=2 * rows * (INPUT_SIZE * H1 + H1 * H2 + H2 * H2 + H2 * H1 + H1 * OUT_PAD),
        transcendentals=0,
        bytes_accessed=rows * (INPUT_SIZE * 4 + OUT_PAD * 4) + weight_bytes,
    )

    def run(single_buffer_weights):
        resident = lambda a: _resident_spec(a.shape, single_buffer_weights)
        return pl.pallas_call(
            autoencoder_kernel,
            out_shape=jax.ShapeDtypeStruct((rows, OUT_PAD), jnp.float32),
            grid=(grid0,),
            in_specs=[
                pl.BlockSpec((tile, INPUT_SIZE), lambda i: (i, 0)),   # x batch tile
                resident(w1),
                resident(w2),
                resident(w34),
                resident(w5),
                resident(w6p),
                resident(bias),
            ],
            out_specs=pl.BlockSpec((tile, OUT_PAD), lambda i: (i, 0)),
            compiler_params=pltpu.CompilerParams(
                dimension_semantics=_dimension_semantics(grid0),
                vmem_limit_bytes=32 * 1024 * 1024,      # headroom for tile_b up to ~4096 on v5e
            ),
            cost_estimate=cost,
        )(x, w1, w2, w34, w5, w6p, bias)

    try:
        out = run(True)                                 # single-buffered resident weights
    except Exception:
        out = run(False)                                # fallback: default (double) buffering

    return out[:batch, :INPUT_SIZE]


def init_params(key):
    """Deterministic init matching PyTorch nn.Linear default (uniform +/- 1/sqrt(fan_in))."""
    layer_dims = [
        (INPUT_SIZE, H1),        # encoder L1
        (H1, H2),                # encoder L2
        (H2, ENCODING_SIZE),     # encoder L3 (bottleneck)
        (ENCODING_SIZE, H2),     # decoder L1
        (H2, H1),                # decoder L2
        (H1, INPUT_SIZE),        # decoder L3
    ]
    params = []
    for (fan_in, fan_out) in layer_dims:
        key, kw, kb = jax.random.split(key, 3)
        bound = 1.0 / jnp.sqrt(jnp.float32(fan_in))
        w = jax.random.uniform(kw, (fan_in, fan_out), jnp.float32, -bound, bound)
        b = jax.random.uniform(kb, (1, fan_out), jnp.float32, -bound, bound)
        params.append((w, b))
    return params


def reference_forward(x, params):
    """Pure-JAX f32 reference (unfused, 6 layers) for correctness checking."""
    h = x
    for i, (w, b) in enumerate(params):
        h = h @ w + b
        # ReLU after every layer except the bottleneck (idx 2) and final output (idx 5)
        if i not in (2, 5):
            h = jnp.maximum(h, 0.0)
    return h


if __name__ == "__main__":
    key = jax.random.PRNGKey(0)
    key, kx = jax.random.split(key)

    batch = 8
    x = jax.random.normal(kx, (batch, INPUT_SIZE), jnp.float32)
    params = init_params(key)
    ref = reference_forward(x, params)

    # Full-precision path: verifies the structure (bottleneck fusion, bias packing) exactly.
    out_f32 = jax.block_until_ready(autoencoder_forward(x, pack_params(params, jnp.float32)))
    assert out_f32.shape == (batch, INPUT_SIZE), out_f32.shape
    assert jnp.allclose(out_f32, ref, atol=1e-4, rtol=1e-4), "f32 path mismatch vs reference"

    # Default fast path: bf16 MXU operands, f32 accumulation (looser tolerance for bf16).
    out_bf16 = jax.block_until_ready(autoencoder_forward(x, pack_params(params)))
    assert out_bf16.shape == (batch, INPUT_SIZE), out_bf16.shape
    assert jnp.allclose(out_bf16, ref, atol=5e-2, rtol=5e-2), "bf16 path mismatch vs reference"

    print("KERNEL_OK")
</pallas_src>

<mosaic_0001>
module attributes {stable_mosaic.version = 11 : i64} {
  func.func @autoencoder_kernel(%arg0: i32, %arg1: memref<8x30xf32, #tpu.memory_space<vmem>>, %arg2: memref<30x64xf32, #tpu.memory_space<vmem>>, %arg3: memref<64x32xf32, #tpu.memory_space<vmem>>, %arg4: memref<32x32xf32, #tpu.memory_space<vmem>>, %arg5: memref<32x64xf32, #tpu.memory_space<vmem>>, %arg6: memref<64x128xf32, #tpu.memory_space<vmem>>, %arg7: memref<8x128xf32, #tpu.memory_space<vmem>>, %arg8: memref<8x128xf32, #tpu.memory_space<vmem>>) attributes {dimension_semantics = [#tpu.dimension_semantics<parallel>], iteration_bounds = array<i64: 1>, scalar_prefetch = 0 : i64, scratch_operands = 0 : i64, tpu.core_type = #tpu.core_type<tc>, window_params = [{transform_indices = @transform_0, window_bounds = array<i64: 8, 30>}, {pipeline_mode = #tpu.pipeline_mode<synchronous>, transform_indices = @transform_1, window_bounds = array<i64: 30, 64>}, {pipeline_mode = #tpu.pipeline_mode<synchronous>, transform_indices = @transform_2, window_bounds = array<i64: 64, 32>}, {pipeline_mode = #tpu.pipeline_mode<synchronous>, transform_indices = @transform_3, window_bounds = array<i64: 32, 32>}, {pipeline_mode = #tpu.pipeline_mode<synchronous>, transform_indices = @transform_4, window_bounds = array<i64: 32, 64>}, {pipeline_mode = #tpu.pipeline_mode<synchronous>, transform_indices = @transform_5, window_bounds = array<i64: 64, 128>}, {pipeline_mode = #tpu.pipeline_mode<synchronous>, transform_indices = @transform_6, window_bounds = array<i64: 8, 128>}, {transform_indices = @transform_7, window_bounds = array<i64: 8, 128>}]} {
    %c0 = arith.constant 0 : index
    %c0_0 = arith.constant 0 : index
    %0 = vector.load %arg7[%c0, %c0_0] : memref<8x128xf32, #tpu.memory_space<vmem>>, vector<8x128xf32>
    %c0_1 = arith.constant 0 : index
    %c0_2 = arith.constant 0 : index
    %1 = vector.load %arg1[%c0_1, %c0_2] : memref<8x30xf32, #tpu.memory_space<vmem>>, vector<8x30xf32>
    %c0_3 = arith.constant 0 : index
    %c0_4 = arith.constant 0 : index
    %2 = vector.load %arg2[%c0_3, %c0_4] : memref<30x64xf32, #tpu.memory_space<vmem>>, vector<30x64xf32>
    %cst = arith.constant dense<0.000000e+00> : vector<8x64xf32>
    %3 = tpu.matmul %1, %2, %cst {dimension_numbers = #tpu.dot_dimension_numbers<[1], [0], [0], [1], [0, 0, 1, 1], [], []>} : vector<8x30xf32>, vector<30x64xf32>, vector<8x64xf32> -> vector<8x64xf32>
    %4 = vector.extract_strided_slice %0 {offsets = [0, 0], sizes = [1, 64], strides = [1, 1]} : vector<8x128xf32> to vector<1x64xf32>
    %5 = vector.broadcast %4 : vector<1x64xf32> to vector<8x64xf32>
    %6 = arith.addf %3, %5 : vector<8x64xf32>
    %cst_5 = arith.constant 0.000000e+00 : f32
    %7 = vector.broadcast %cst_5 : f32 to vector<8x64xf32>
    %8 = arith.maximumf %6, %7 : vector<8x64xf32>
    %c0_6 = arith.constant 0 : index
    %c0_7 = arith.constant 0 : index
    %9 = vector.load %arg3[%c0_6, %c0_7] : memref<64x32xf32, #tpu.memory_space<vmem>>, vector<64x32xf32>
    %cst_8 = arith.constant dense<0.000000e+00> : vector<8x32xf32>
    %10 = tpu.matmul %8, %9, %cst_8 {dimension_numbers = #tpu.dot_dimension_numbers<[1], [0], [0], [1], [0, 0, 1, 1], [], []>} : vector<8x64xf32>, vector<64x32xf32>, vector<8x32xf32> -> vector<8x32xf32>
    %11 = vector.extract_strided_slice %0 {offsets = [1, 0], sizes = [1, 32], strides = [1, 1]} : vector<8x128xf32> to vector<1x32xf32>
    %12 = vector.broadcast %11 : vector<1x32xf32> to vector<8x32xf32>
    %13 = arith.addf %10, %12 : vector<8x32xf32>
    %cst_9 = arith.constant 0.000000e+00 : f32
    %14 = vector.broadcast %cst_9 : f32 to vector<8x32xf32>
    %15 = arith.maximumf %13, %14 : vector<8x32xf32>
    %c0_10 = arith.constant 0 : index
    %c0_11 = arith.constant 0 : index
    %16 = vector.load %arg4[%c0_10, %c0_11] : memref<32x32xf32, #tpu.memory_space<vmem>>, vector<32x32xf32>
    %cst_12 = arith.constant dense<0.000000e+00> : vector<8x32xf32>
    %17 = tpu.matmul %15, %16, %cst_12 {dimension_numbers = #tpu.dot_dimension_numbers<[1], [0], [0], [1], [0, 0, 1, 1], [], []>} : vector<8x32xf32>, vector<32x32xf32>, vector<8x32xf32> -> vector<8x32xf32>
    %18 = vector.extract_strided_slice %0 {offsets = [2, 0], sizes = [1, 32], strides = [1, 1]} : vector<8x128xf32> to vector<1x32xf32>
    %19 = vector.broadcast %18 : vector<1x32xf32> to vector<8x32xf32>
    %20 = arith.addf %17, %19 : vector<8x32xf32>
    %cst_13 = arith.constant 0.000000e+00 : f32
    %21 = vector.broadcast %cst_13 : f32 to vector<8x32xf32>
    %22 = arith.maximumf %20, %21 : vector<8x32xf32>
    %c0_14 = arith.constant 0 : index
    %c0_15 = arith.constant 0 : index
    %23 = vector.load %arg5[%c0_14, %c0_15] : memref<32x64xf32, #tpu.memory_space<vmem>>, vector<32x64xf32>
    %cst_16 = arith.constant dense<0.000000e+00> : vector<8x64xf32>
    %24 = tpu.matmul %22, %23, %cst_16 {dimension_numbers = #tpu.dot_dimension_numbers<[1], [0], [0], [1], [0, 0, 1, 1], [], []>} : vector<8x32xf32>, vector<32x64xf32>, vector<8x64xf32> -> vector<8x64xf32>
    %25 = vector.extract_strided_slice %0 {offsets = [3, 0], sizes = [1, 64], strides = [1, 1]} : vector<8x128xf32> to vector<1x64xf32>
    %26 = vector.broadcast %25 : vector<1x64xf32> to vector<8x64xf32>
    %27 = arith.addf %24, %26 : vector<8x64xf32>
    %cst_17 = arith.constant 0.000000e+00 : f32
    %28 = vector.broadcast %cst_17 : f32 to vector<8x64xf32>
    %29 = arith.maximumf %27, %28 : vector<8x64xf32>
    %c0_18 = arith.constant 0 : index
    %c0_19 = arith.constant 0 : index
    %30 = vector.load %arg6[%c0_18, %c0_19] : memref<64x128xf32, #tpu.memory_space<vmem>>, vector<64x128xf32>
    %cst_20 = arith.constant dense<0.000000e+00> : vector<8x128xf32>
    %31 = tpu.matmul %29, %30, %cst_20 {dimension_numbers = #tpu.dot_dimension_numbers<[1], [0], [0], [1], [0, 0, 1, 1], [], []>} : vector<8x64xf32>, vector<64x128xf32>, vector<8x128xf32> -> vector<8x128xf32>
    %32 = vector.extract_strided_slice %0 {offsets = [4, 0], sizes = [1, 128], strides = [1, 1]} : vector<8x128xf32> to vector<1x128xf32>
    %33 = vector.broadcast %32 : vector<1x128xf32> to vector<8x128xf32>
    %34 = arith.addf %31, %33 : vector<8x128xf32>
    %c0_21 = arith.constant 0 : index
    %c0_22 = arith.constant 0 : index
    %35 = vector.load %arg8[%c0_21, %c0_22] : memref<8x128xf32, #tpu.memory_space<vmem>>, vector<8x128xf32>
    tpu.vector_store %arg8[%c0_21, %c0_22], %34 {strides = array<i32>} : memref<8x128xf32, #tpu.memory_space<vmem>>, vector<8x128xf32>,
    return
  }
  func.func @transform_0(%arg0: i32) -> (i32, i32) {
    %c0_i32 = arith.constant 0 : i32
    %c0_i32_0 = arith.constant 0 : i32
    return %arg0, %c0_i32 : i32, i32
  }
  func.func @transform_1(%arg0: i32) -> (i32, i32) {
    %c0_i32 = arith.constant 0 : i32
    %c0_i32_0 = arith.constant 0 : i32
    %c0_i32_1 = arith.constant 0 : i32
    return %c0_i32, %c0_i32_0 : i32, i32
  }
  func.func @transform_2(%arg0: i32) -> (i32, i32) {
    %c0_i32 = arith.constant 0 : i32
    %c0_i32_0 = arith.constant 0 : i32
    %c0_i32_1 = arith.constant 0 : i32
    return %c0_i32, %c0_i32_0 : i32, i32
  }
  func.func @transform_3(%arg0: i32) -> (i32, i32) {
    %c0_i32 = arith.constant 0 : i32
    %c0_i32_0 = arith.constant 0 : i32
    %c0_i32_1 = arith.constant 0 : i32
    return %c0_i32, %c0_i32_0 : i32, i32
  }
  func.func @transform_4(%arg0: i32) -> (i32, i32) {
    %c0_i32 = arith.constant 0 : i32
    %c0_i32_0 = arith.constant 0 : i32
    %c0_i32_1 = arith.constant 0 : i32
    return %c0_i32, %c0_i32_0 : i32, i32
  }
  func.func @transform_5(%arg0: i32) -> (i32, i32) {
    %c0_i32 = arith.constant 0 : i32
    %c0_i32_0 = arith.constant 0 : i32
    %c0_i32_1 = arith.constant 0 : i32
    return %c0_i32, %c0_i32_0 : i32, i32
  }
  func.func @transform_6(%arg0: i32) -> (i32, i32) {
    %c0_i32 = arith.constant 0 : i32
    %c0_i32_0 = arith.constant 0 : i32
    %c0_i32_1 = arith.constant 0 : i32
    return %c0_i32, %c0_i32_0 : i32, i32
  }
  func.func @transform_7(%arg0: i32) -> (i32, i32) {
    %c0_i32 = arith.constant 0 : i32
    %c0_i32_0 = arith.constant 0 : i32
    return %arg0, %c0_i32 : i32, i32
  }
}

module attributes {stable_mosaic.version = 11 : i64} {
  func.func @autoencoder_kernel(%arg0: i32, %arg1: memref<8x30xf32, #tpu.memory_space<vmem>>, %arg2: memref<30x64xf32, #tpu.memory_space<vmem>>, %arg3: memref<64x32xf32, #tpu.memory_space<vmem>>, %arg4: memref<32x32xf32, #tpu.memory_space<vmem>>, %arg5: memref<32x64xf32, #tpu.memory_space<vmem>>, %arg6: memref<64x128xf32, #tpu.memory_space<vmem>>, %arg7: memref<8x128xf32, #tpu.memory_space<vmem>>, %arg8: memref<8x128xf32, #tpu.memory_space<vmem>>) attributes {dimension_semantics = [#tpu.dimension_semantics<parallel>], iteration_bounds = array<i64: 1>, scalar_prefetch = 0 : i64, scratch_operands = 0 : i64, tpu.core_type = #tpu.core_type<tc>, window_params = [{transform_indices = @transform_0, window_bounds = array<i64: 8, 30>}, {pipeline_mode = #tpu.pipeline_mode<synchronous>, transform_indices = @transform_1, window_bounds = array<i64: 30, 64>}, {pipeline_mode = #tpu.pipeline_mode<synchronous>, transform_indices = @transform_2, window_bounds = array<i64: 64, 32>}, {pipeline_mode = #tpu.pipeline_mode<synchronous>, transform_indices = @transform_3, window_bounds = array<i64: 32, 32>}, {pipeline_mode = #tpu.pipeline_mode<synchronous>, transform_indices = @transform_4, window_bounds = array<i64: 32, 64>}, {pipeline_mode = #tpu.pipeline_mode<synchronous>, transform_indices = @transform_5, window_bounds = array<i64: 64, 128>}, {pipeline_mode = #tpu.pipeline_mode<synchronous>, transform_indices = @transform_6, window_bounds = array<i64: 8, 128>}, {transform_indices = @transform_7, window_bounds = array<i64: 8, 128>}]} {
    %c0 = arith.constant 0 : index
    %c0_0 = arith.constant 0 : index
    %0 = vector.load %arg7[%c0, %c0_0] : memref<8x128xf32, #tpu.memory_space<vmem>>, vector<8x128xf32>
    %c0_1 = arith.constant 0 : index
    %c0_2 = arith.constant 0 : index
    %1 = vector.load %arg1[%c0_1, %c0_2] : memref<8x30xf32, #tpu.memory_space<vmem>>, vector<8x30xf32>
    %c0_3 = arith.constant 0 : index
    %c0_4 = arith.constant 0 : index
    %2 = vector.load %arg2[%c0_3, %c0_4] : memref<30x64xf32, #tpu.memory_space<vmem>>, vector<30x64xf32>
    %cst = arith.constant dense<0.000000e+00> : vector<8x64xf32>
    %3 = tpu.matmul %1, %2, %cst {dimension_numbers = #tpu.dot_dimension_numbers<[1], [0], [0], [1], [0, 0, 1, 1], [], []>} : vector<8x30xf32>, vector<30x64xf32>, vector<8x64xf32> -> vector<8x64xf32>
    %4 = vector.extract_strided_slice %0 {offsets = [0, 0], sizes = [1, 64], strides = [1, 1]} : vector<8x128xf32> to vector<1x64xf32>
    %5 = vector.broadcast %4 : vector<1x64xf32> to vector<8x64xf32>
    %6 = arith.addf %3, %5 : vector<8x64xf32>
    %cst_5 = arith.constant 0.000000e+00 : f32
    %7 = vector.broadcast %cst_5 : f32 to vector<8x64xf32>
    %8 = arith.maximumf %6, %7 : vector<8x64xf32>
    %c0_6 = arith.constant 0 : index
    %c0_7 = arith.constant 0 : index
    %9 = vector.load %arg3[%c0_6, %c0_7] : memref<64x32xf32, #tpu.memory_space<vmem>>, vector<64x32xf32>
    %cst_8 = arith.constant dense<0.000000e+00> : vector<8x32xf32>
    %10 = tpu.matmul %8, %9, %cst_8 {dimension_numbers = #tpu.dot_dimension_numbers<[1], [0], [0], [1], [0, 0, 1, 1], [], []>} : vector<8x64xf32>, vector<64x32xf32>, vector<8x32xf32> -> vector<8x32xf32>
    %11 = vector.extract_strided_slice %0 {offsets = [1, 0], sizes = [1, 32], strides = [1, 1]} : vector<8x128xf32> to vector<1x32xf32>
    %12 = vector.broadcast %11 : vector<1x32xf32> to vector<8x32xf32>
    %13 = arith.addf %10, %12 : vector<8x32xf32>
    %cst_9 = arith.constant 0.000000e+00 : f32
    %14 = vector.broadcast %cst_9 : f32 to vector<8x32xf32>
    %15 = arith.maximumf %13, %14 : vector<8x32xf32>
    %c0_10 = arith.constant 0 : index
    %c0_11 = arith.constant 0 : index
    %16 = vector.load %arg4[%c0_10, %c0_11] : memref<32x32xf32, #tpu.memory_space<vmem>>, vector<32x32xf32>
    %cst_12 = arith.constant dense<0.000000e+00> : vector<8x32xf32>
    %17 = tpu.matmul %15, %16, %cst_12 {dimension_numbers = #tpu.dot_dimension_numbers<[1], [0], [0], [1], [0, 0, 1, 1], [], []>} : vector<8x32xf32>, vector<32x32xf32>, vector<8x32xf32> -> vector<8x32xf32>
    %18 = vector.extract_strided_slice %0 {offsets = [2, 0], sizes = [1, 32], strides = [1, 1]} : vector<8x128xf32> to vector<1x32xf32>
    %19 = vector.broadcast %18 : vector<1x32xf32> to vector<8x32xf32>
    %20 = arith.addf %17, %19 : vector<8x32xf32>
    %cst_13 = arith.constant 0.000000e+00 : f32
    %21 = vector.broadcast %cst_13 : f32 to vector<8x32xf32>
    %22 = arith.maximumf %20, %21 : vector<8x32xf32>
    %c0_14 = arith.constant 0 : index
    %c0_15 = arith.constant 0 : index
    %23 = vector.load %arg5[%c0_14, %c0_15] : memref<32x64xf32, #tpu.memory_space<vmem>>, vector<32x64xf32>
    %cst_16 = arith.constant dense<0.000000e+00> : vector<8x64xf32>
    %24 = tpu.matmul %22, %23, %cst_16 {dimension_numbers = #tpu.dot_dimension_numbers<[1], [0], [0], [1], [0, 0, 1, 1], [], []>} : vector<8x32xf32>, vector<32x64xf32>, vector<8x64xf32> -> vector<8x64xf32>
    %25 = vector.extract_strided_slice %0 {offsets = [3, 0], sizes = [1, 64], strides = [1, 1]} : vector<8x128xf32> to vector<1x64xf32>
    %26 = vector.broadcast %25 : vector<1x64xf32> to vector<8x64xf32>
    %27 = arith.addf %24, %26 : vector<8x64xf32>
    %cst_17 = arith.constant 0.000000e+00 : f32
    %28 = vector.broadcast %cst_17 : f32 to vector<8x64xf32>
    %29 = arith.maximumf %27, %28 : vector<8x64xf32>
    %c0_18 = arith.constant 0 : index
    %c0_19 = arith.constant 0 : index
    %30 = vector.load %arg6[%c0_18, %c0_19] : memref<64x128xf32, #tpu.memory_space<vmem>>, vector<64x128xf32>
    %cst_20 = arith.constant dense<0.000000e+00> : vector<8x128xf32>
    %31 = tpu.matmul %29, %30, %cst_20 {dimension_numbers = #tpu.dot_dimension_numbers<[1], [0], [0], [1], [0, 0, 1, 1], [], []>} : vector<8x64xf32>, vector<64x128xf32>, vector<8x128xf32> -> vector<8x128xf32>
    %32 = vector.extract_strided_slice %0 {offsets = [4, 0], sizes = [1, 128], strides = [1, 1]} : vector<8x128xf32> to vector<1x128xf32>
    %33 = vector.broadcast %32 : vector<1x128xf32> to vector<8x128xf32>
    %34 = arith.addf %31, %33 : vector<8x128xf32>
    %c0_21 = arith.constant 0 : index
    %c0_22 = arith.constant 0 : index
    %35 = vector.load %arg8[%c0_21, %c0_22] : memref<8x128xf32, #tpu.memory_space<vmem>>, vector<8x128xf32>
    tpu.vector_store %arg8[%c0_21, %c0_22], %34 {strides = array<i32>} : memref<8x128xf32, #tpu.memory_space<vmem>>, vector<8x128xf32>,
    return
  }
  func.func @transform_0(%arg0: i32) -> (i32, i32) {
    %c0_i32 = arith.constant 0 : i32
    %c0_i32_0 = arith.constant 0 : i32
    return %arg0, %c0_i32 : i32, i32
  }
  func.func @transform_1(%arg0: i32) -> (i32, i32) {
    %c0_i32 = arith.constant 0 : i32
    %c0_i32_0 = arith.constant 0 : i32
    %c0_i32_1 = arith.constant 0 : i32
    return %c0_i32, %c0_i32_0 : i32, i32
  }
  func.func @transform_2(%arg0: i32) -> (i32, i32) {
    %c0_i32 = arith.constant 0 : i32
    %c0_i32_0 = arith.constant 0 : i32
    %c0_i32_1 = arith.constant 0 : i32
    return %c0_i32, %c0_i32_0 : i32, i32
  }
  func.func @transform_3(%arg0: i32) -> (i32, i32) {
    %c0_i32 = arith.constant 0 : i32
    %c0_i32_0 = arith.constant 0 : i32
    %c0_i32_1 = arith.constant 0 : i32
    return %c0_i32, %c0_i32_0 : i32, i32
  }
  func.func @transform_4(%arg0: i32) -> (i32, i32) {
    %c0_i32 = arith.constant 0 : i32
    %c0_i32_0 = arith.constant 0 : i32
    %c0_i32_1 = arith.constant 0 : i32
    return %c0_i32, %c0_i32_0 : i32, i32
  }
  func.func @transform_5(%arg0: i32) -> (i32, i32) {
    %c0_i32 = arith.constant 0 : i32
    %c0_i32_0 = arith.constant 0 : i32
    %c0_i32_1 = arith.constant 0 : i32
    return %c0_i32, %c0_i32_0 : i32, i32
  }
  func.func @transform_6(%arg0: i32) -> (i32, i32) {
    %c0_i32 = arith.constant 0 : i32
    %c0_i32_0 = arith.constant 0 : i32
    %c0_i32_1 = arith.constant 0 : i32
    return %c0_i32, %c0_i32_0 : i32, i32
  }
  func.func @transform_7(%arg0: i32) -> (i32, i32) {
    %c0_i32 = arith.constant 0 : i32
    %c0_i32_0 = arith.constant 0 : i32
    return %arg0, %c0_i32 : i32, i32
  }
}

</mosaic_0001>

<llo_original>
// kernel: tpu_custom_call.1
$region0: #{tpu_custom_call.1}
  #allocation0 [shape = 'u32[]', space=smem, size = 0x4, offset = 0x4, fixed_abs, tag = 'smem constant byte address 0x4 - core index']
  #allocation1 [shape = 'u32[144,128]{1,0:T(1,128)}', space=vmem, size = 0x12000, scoped, tag = 'internal scratch']
  %s0 = inlined_call_operand.vmem [shape: f32[8,30], index: 0, kind: input, shape index: {}]
  %s1 = inlined_call_operand.vmem [shape: f32[30,64], index: 1, kind: input, shape index: {}]
  %s2 = inlined_call_operand.vmem [shape: f32[64,32], index: 2, kind: input, shape index: {}]
  %s3 = inlined_call_operand.hbm [shape: f32[32,32], index: 3, kind: input, shape index: {}]
  %s4 = inlined_call_operand.hbm [shape: f32[32,64], index: 4, kind: input, shape index: {}]
  %s5 = inlined_call_operand.vmem [shape: f32[64,128], index: 5, kind: input, shape index: {}]
  %s6 = inlined_call_operand.hbm [shape: f32[8,128], index: 6, kind: input, shape index: {}]
  %s7 = inlined_call_operand.hbm [shape: f32[8,128], index: 7, kind: output, shape index: {}]
  %s8 = sld [smem:[#allocation0]]
  $region50: #{tpu_custom_call.1} parent=0
    _
  %s10 = ssub.s32 1, %s8
  %s11 = scalar_select 0, %s10, %s8
  $region1: #{tpu_custom_call.1} parent=0
    #allocation2 [shape = 'u8[16384]{0}', space=vmem, size = 0x4000, scoped, tag = 'input window, operand 3, single buffered']
    #allocation3 [shape = 's32[1]{0}', space=sflag, size = 0x4, scoped, tag = 'scoped memory for tpu_custom_call.1']
    #allocation4 [shape = 's32[1]{0}', space=sflag, size = 0x4, scoped, tag = 'scoped memory for tpu_custom_call.1']
    #allocation5 [shape = 'u8[16384]{0}', space=vmem, size = 0x4000, scoped, tag = 'input window, operand 4, single buffered']
    #allocation6 [shape = 's32[1]{0}', space=sflag, size = 0x4, scoped, tag = 'scoped memory for tpu_custom_call.1']
    #allocation7 [shape = 'u8[4096]{0}', space=vmem, size = 0x1000, scoped, tag = 'input window, operand 6, single buffered']
    #allocation8 [shape = 'u8[4096]{0}', space=vmem, size = 0x1000, scoped, tag = 'output window, operand 0, single buffered']
    %12 = vsyncpa [#allocation3], 0
    %13 = vsyncpa [#allocation6], 0
    %14 = vsyncpa [#allocation4], 0
    // Predicated region
    $region2: #{tpu_custom_call.1} parent=1 // pred_check
      _
    $region3: #{tpu_custom_call.1} parent=1 // pred_check_branch
      %16 = sbr.rel (0) target = $region5
    $region4: #{tpu_custom_call.1} parent=1 // pred_region
      _
    $region5: #{tpu_custom_call.1} parent=1 // pred_fallthru
      _
    // Predicated region
    $region6: #{tpu_custom_call.1} parent=1 // pred_check
      _
    $region7: #{tpu_custom_call.1} parent=1 // pred_check_branch
      %18 = sbr.rel (0) target = $region9
    $region8: #{tpu_custom_call.1} parent=1 // pred_region
      _
    $region9: #{tpu_custom_call.1} parent=1 // pred_fallthru
      _
    // Predicated region
    $region10: #{tpu_custom_call.1} parent=1 // pred_check
      _
    $region11: #{tpu_custom_call.1} parent=1 // pred_check_branch
      %20 = sbr.rel (0) target = $region13
    $region12: #{tpu_custom_call.1} parent=1 // pred_region
      _
    $region13: #{tpu_custom_call.1} parent=1 // pred_fallthru
      _
    // Predicated region
    $region14: #{tpu_custom_call.1} parent=1 // pred_check
      _
    $region15: #{tpu_custom_call.1} parent=1 // pred_check_branch
      %22 = sbr.rel (0) target = $region17
    $region16: #{tpu_custom_call.1} parent=1 // pred_region
      %s24 = ssub.s32 512, 512
      %25 = vsyncadd [#allocation3], %s24
      %s26 = sshll.u32 [#allocation2], 4
      %s27 = int_to_ptr.vmem [resolvable:$true] %s26
      %32 = dma.hbm_to_vmem [thread:$0]  %s3, 512, %s27, [#allocation3], 128, 128, 8
    $region17: #{tpu_custom_call.1} parent=1 // pred_fallthru
      _
    // Predicated region
    $region18: #{tpu_custom_call.1} parent=1 // pred_check
      _
    $region19: #{tpu_custom_call.1} parent=1 // pred_check_branch
      %34 = sbr.rel (0) target = $region21
    $region20: #{tpu_custom_call.1} parent=1 // pred_region
      %s36 = ssub.s32 512, 512
      %37 = vsyncadd [#allocation6], %s36
      %s38 = sshll.u32 [#allocation5], 4
      %s39 = int_to_ptr.vmem [resolvable:$true] %s38
      %44 = dma.hbm_to_vmem [thread:$0]  %s4, 512, %s39, [#allocation6], 128, 128, 8
    $region21: #{tpu_custom_call.1} parent=1 // pred_fallthru
      _
    // Predicated region
    $region22: #{tpu_custom_call.1} parent=1 // pred_check
      _
    $region23: #{tpu_custom_call.1} parent=1 // pred_check_branch
      %46 = sbr.rel (0) target = $region25
    $region24: #{tpu_custom_call.1} parent=1 // pred_region
      _
    $region25: #{tpu_custom_call.1} parent=1 // pred_fallthru
      _
    // Predicated region
    $region26: #{tpu_custom_call.1} parent=1 // pred_check
      _
    $region27: #{tpu_custom_call.1} parent=1 // pred_check_branch
      %48 = sbr.rel (0) target = $region29
    $region28: #{tpu_custom_call.1} parent=1 // pred_region
      %s50 = ssub.s32 128, 128
      %51 = vsyncadd [#allocation6], %s50
      %s53 = sshll.u32 [#allocation7], 4
      %s54 = int_to_ptr.vmem [resolvable:$true] %s53
      %56 = dma.hbm_to_vmem [thread:$0]  %s6, 128, %s54, [#allocation6]
    $region29: #{tpu_custom_call.1} parent=1 // pred_fallthru
      _
    // Predicated region
    $region30: #{tpu_custom_call.1} parent=1 // pred_check
      _
    $region31: #{tpu_custom_call.1} parent=1 // pred_check_branch
      %58 = sbr.rel (0) target = $region33
    $region32: #{tpu_custom_call.1} parent=1 // pred_region
      %59 = dma.done [#allocation3], 512
    $region33: #{tpu_custom_call.1} parent=1 // pred_fallthru
      _
    // Predicated region
    $region34: #{tpu_custom_call.1} parent=1 // pred_check
      _
    $region35: #{tpu_custom_call.1} parent=1 // pred_check_branch
      %61 = sbr.rel (0) target = $region37
    $region36: #{tpu_custom_call.1} parent=1 // pred_region
      %62 = dma.done [#allocation6], 512
    $region37: #{tpu_custom_call.1} parent=1 // pred_fallthru
      _
    // Predicated region
    $region38: #{tpu_custom_call.1} parent=1 // pred_check
      _
    $region39: #{tpu_custom_call.1} parent=1 // pred_check_branch
      %64 = sbr.rel (0) target = $region41
    $region40: #{tpu_custom_call.1} parent=1 // pred_region
      %65 = dma.done [#allocation6], 128
    $region41: #{tpu_custom_call.1} parent=1 // pred_fallthru
      _
    %v66 = vld [vmem:[#allocation7] sm:$0xff]
    %v67 = vld [vmem:[%s0] sm:$0xff]
    %v68 = vld [vmem:[%s1] sm:$0xff]
    %v69 = vld [vmem:[%s1 + $0x8] sm:$0xff]
    %v70 = vld [vmem:[%s1 + $0x10] sm:$0xff]
    %v71 = vld [vmem:[%s1 + $0x18] sm:$0x3f]
    %v72 = vlaneseq
    %v73 = vshrl.u32 %v72, 7
    %v74 = vsub.s32 0, %v73
    %v75 = vrot.slane %v66, %v74
    %vm76 = vcmask 244736
    %v78 = vsel %vm76, %v67, 0
    %vm80 = vcmask 1045504
    %v82 = vsel %vm80, %v71, 0
    %84 = vmatprep.subr.mxu0 0.0
    %85 = vmatpush1.msra.mxu0 0.0
    %86 = vmatprep.subr.mxu0 0.0
    %87 = vmatpush1.msra.mxu0 0.0
    %88 = vmatprep.subr.mxu0 0.0
    %89 = vmatpush1.msra.mxu0 0.0
    %90 = vmatprep.subr.mxu0 0.0
    %91 = vmatpush1.msra.mxu0 0.0
    %92 = vmatprep.subr.mxu0 0.0
    %93 = vmatpush1.msra.mxu0 0.0
    %94 = vmatprep.subr.mxu0 0.0
    %95 = vmatpush1.msra.mxu0 0.0
    %96 = vmatprep.subr.mxu0 0.0
    %97 = vmatpush1.msra.mxu0 0.0
    %98 = vmatprep.subr.mxu0 0.0
    %99 = vmatpush1.msra.mxu0 0.0
    %100 = vmatprep.subr.mxu0 0.0
    %101 = vmatpush1.msra.mxu0 0.0
    %102 = vmatprep.subr.mxu0 0.0
    %103 = vmatpush1.msra.mxu0 0.0
    %104 = vmatprep.subr.mxu0 0.0
    %105 = vmatpush1.msra.mxu0 0.0
    %106 = vmatprep.subr.mxu0 0.0
    %107 = vmatpush1.msra.mxu0 0.0
    %108 = vmatprep.subr.mxu0 0.0
    %109 = vmatpush1.msra.mxu0 %v82
    %110 = vmatprep.subr.mxu0 0.0
    %111 = vmatpush1.msra.mxu0 %v70
    %112 = vmatprep.subr.mxu0 0.0
    %113 = vmatpush1.msra.mxu0 %v69
    %114 = vmatprep.subr.mxu0 0.0
    %115 = vmatpush1.msra.mxu0 %v68
    %116 = vmatprep.subr.mxu0 0.0
    %117 = vmatpush2.msra.mxu0 0.0
    %118 = vmatprep.subr.mxu0 0.0
    %119 = vmatpush2.msra.mxu0 0.0
    %120 = vmatprep.subr.mxu0 0.0
    %121 = vmatpush2.msra.mxu0 0.0
    %122 = vmatprep.subr.mxu0 0.0
    %123 = vmatpush2.msra.mxu0 0.0
    %124 = vmatprep.subr.mxu0 0.0
    %125 = vmatpush2.msra.mxu0 0.0
    %126 = vmatprep.subr.mxu0 0.0
    %127 = vmatpush2.msra.mxu0 0.0
    %128 = vmatprep.subr.mxu0 0.0
    %129 = vmatpush2.msra.mxu0 0.0
    %130 = vmatprep.subr.mxu0 0.0
    %131 = vmatpush2.msra.mxu0 0.0
    %132 = vmatprep.subr.mxu0 0.0
    %133 = vmatpush2.msra.mxu0 0.0
    %134 = vmatprep.subr.mxu0 0.0
    %135 = vmatpush2.msra.mxu0 0.0
    %136 = vmatprep.subr.mxu0 0.0
    %137 = vmatpush2.msra.mxu0 0.0
    %138 = vmatprep.subr.mxu0 0.0
    %139 = vmatpush2.msra.mxu0 0.0
    %140 = vmatprep.subr.mxu0 0.0
    %141 = vmatpush2.msra.mxu0 0.0
    %142 = vmatprep.subr.mxu0 0.0
    %143 = vmatpush2.msra.mxu0 0.0
    %144 = vmatprep.subr.mxu0 0.0
    %145 = vmatpush2.msra.mxu0 0.0
    %146 = vmatprep.subr.mxu0 0.0
    %147 = vmatpush2.msra.mxu0 0.0
    %148 = vmatprep.mubr.f32.mxu0 0.0
    %149 = vmatmul.mubr.f32.gmra.mxu0 %v78
    %v150 = vpop.f32.mrf.mxu0
    %v151 = vadd.f32 %v75, %v150
    %v152 = vpop.f32.mrf.mxu0
    %153 = vdwg.mxu0
    %v154 = vmax.f32 %v151, 0.0
    %v155 = vld [vmem:[%s2] sm:$0xff]
    %v156 = vld [vmem:[%s2 + $0x8] sm:$0xff]
    %v157 = vld [vmem:[%s2 + $0x10] sm:$0xff]
    %v158 = vld [vmem:[%s2 + $0x18] sm:$0xff]
    %v159 = vld [vmem:[%s2 + $0x20] sm:$0xff]
    %v160 = vld [vmem:[%s2 + $0x28] sm:$0xff]
    %v161 = vld [vmem:[%s2 + $0x30] sm:$0xff]
    %v162 = vld [vmem:[%s2 + $0x38] sm:$0xff]
    %v163 = vlaneseq
    %v164 = vshrl.u32 %v163, 7
    %v165 = vsub.s32 1, %v164
    %v166 = vrot.slane %v66, %v165
    %vm167 = vcmask 523264
    %v169 = vsel %vm167, %v154, 0
    %171 = vmatprep.subr.mxu0 0.0
    %172 = vmatpush1.msra.mxu0 0.0
    %173 = vmatprep.subr.mxu0 0.0
    %174 = vmatpush1.msra.mxu0 0.0
    %175 = vmatprep.subr.mxu0 0.0
    %176 = vmatpush1.msra.mxu0 0.0
    %177 = vmatprep.subr.mxu0 0.0
    %178 = vmatpush1.msra.mxu0 0.0
    %179 = vmatprep.subr.mxu0 0.0
    %180 = vmatpush1.msra.mxu0 0.0
    %181 = vmatprep.subr.mxu0 0.0
    %182 = vmatpush1.msra.mxu0 0.0
    %183 = vmatprep.subr.mxu0 0.0
    %184 = vmatpush1.msra.mxu0 0.0
    %185 = vmatprep.subr.mxu0 0.0
    %186 = vmatpush1.msra.mxu0 0.0
    %187 = vmatprep.subr.mxu0 0.0
    %188 = vmatpush1.msra.mxu0 %v162
    %189 = vmatprep.subr.mxu0 0.0
    %190 = vmatpush1.msra.mxu0 %v161
    %191 = vmatprep.subr.mxu0 0.0
    %192 = vmatpush1.msra.mxu0 %v160
    %193 = vmatprep.subr.mxu0 0.0
    %194 = vmatpush1.msra.mxu0 %v159
    %195 = vmatprep.subr.mxu0 0.0
    %196 = vmatpush1.msra.mxu0 %v158
    %197 = vmatprep.subr.mxu0 0.0
    %198 = vmatpush1.msra.mxu0 %v157
    %199 = vmatprep.subr.mxu0 0.0
    %200 = vmatpush1.msra.mxu0 %v156
    %201 = vmatprep.subr.mxu0 0.0
    %202 = vmatpush1.msra.mxu0 %v155
    %203 = vmatprep.subr.mxu0 0.0
    %204 = vmatpush2.msra.mxu0 0.0
    %205 = vmatprep.subr.mxu0 0.0
    %206 = vmatpush2.msra.mxu0 0.0
    %207 = vmatprep.subr.mxu0 0.0
    %208 = vmatpush2.msra.mxu0 0.0
    %209 = vmatprep.subr.mxu0 0.0
    %210 = vmatpush2.msra.mxu0 0.0
    %211 = vmatprep.subr.mxu0 0.0
    %212 = vmatpush2.msra.mxu0 0.0
    %213 = vmatprep.subr.mxu0 0.0
    %214 = vmatpush2.msra.mxu0 0.0
    %215 = vmatprep.subr.mxu0 0.0
    %216 = vmatpush2.msra.mxu0 0.0
    %217 = vmatprep.subr.mxu0 0.0
    %218 = vmatpush2.msra.mxu0 0.0
    %219 = vmatprep.subr.mxu0 0.0
    %220 = vmatpush2.msra.mxu0 0.0
    %221 = vmatprep.subr.mxu0 0.0
    %222 = vmatpush2.msra.mxu0 0.0
    %223 = vmatprep.subr.mxu0 0.0
    %224 = vmatpush2.msra.mxu0 0.0
    %225 = vmatprep.subr.mxu0 0.0
    %226 = vmatpush2.msra.mxu0 0.0
    %227 = vmatprep.subr.mxu0 0.0
    %228 = vmatpush2.msra.mxu0 0.0
    %229 = vmatprep.subr.mxu0 0.0
    %230 = vmatpush2.msra.mxu0 0.0
    %231 = vmatprep.subr.mxu0 0.0
    %232 = vmatpush2.msra.mxu0 0.0
    %233 = vmatprep.subr.mxu0 0.0
    %234 = vmatpush2.msra.mxu0 0.0
    %235 = vmatprep.mubr.f32.mxu0 0.0
    %236 = vmatmul.mubr.f32.gmra.mxu0 %v169
    %v237 = vpop.f32.mrf.mxu0
    %v238 = vadd.f32 %v166, %v237
    %v239 = vpop.f32.mrf.mxu0
    %240 = vdwg.mxu0
    %v241 = vmax.f32 %v238, 0.0
    %v242 = vld [vmem:[#allocation2] sm:$0xff]
    %v243 = vld [vmem:[#allocation2 + $0x8] sm:$0xff]
    %v244 = vld [vmem:[#allocation2 + $0x10] sm:$0xff]
    %v245 = vld [vmem:[#allocation2 + $0x18] sm:$0xff]
    %v246 = vlaneseq
    %v247 = vshrl.u32 %v246, 7
    %v248 = vsub.s32 2, %v247
    %v249 = vrot.slane %v66, %v248
    %vm250 = vcmask 261120
    %v252 = vsel %vm250, %v241, 0
    %254 = vmatprep.subr.mxu0 0.0
    %255 = vmatpush1.msra.mxu0 0.0
    %256 = vmatprep.subr.mxu0 0.0
    %257 = vmatpush1.msra.mxu0 0.0
    %258 = vmatprep.subr.mxu0 0.0
    %259 = vmatpush1.msra.mxu0 0.0
    %260 = vmatprep.subr.mxu0 0.0
    %261 = vmatpush1.msra.mxu0 0.0
    %262 = vmatprep.subr.mxu0 0.0
    %263 = vmatpush1.msra.mxu0 0.0
    %264 = vmatprep.subr.mxu0 0.0
    %265 = vmatpush1.msra.mxu0 0.0
    %266 = vmatprep.subr.mxu0 0.0
    %267 = vmatpush1.msra.mxu0 0.0
    %268 = vmatprep.subr.mxu0 0.0
    %269 = vmatpush1.msra.mxu0 0.0
    %270 = vmatprep.subr.mxu0 0.0
    %271 = vmatpush1.msra.mxu0 0.0
    %272 = vmatprep.subr.mxu0 0.0
    %273 = vmatpush1.msra.mxu0 0.0
    %274 = vmatprep.subr.mxu0 0.0
    %275 = vmatpush1.msra.mxu0 0.0
    %276 = vmatprep.subr.mxu0 0.0
    %277 = vmatpush1.msra.mxu0 0.0
    %278 = vmatprep.subr.mxu0 0.0
    %279 = vmatpush1.msra.mxu0 %v245
    %280 = vmatprep.subr.mxu0 0.0
    %281 = vmatpush1.msra.mxu0 %v244
    %282 = vmatprep.subr.mxu0 0.0
    %283 = vmatpush1.msra.mxu0 %v243
    %284 = vmatprep.subr.mxu0 0.0
    %285 = vmatpush1.msra.mxu0 %v242
    %286 = vmatprep.subr.mxu0 0.0
    %287 = vmatpush2.msra.mxu0 0.0
    %288 = vmatprep.subr.mxu0 0.0
    %289 = vmatpush2.msra.mxu0 0.0
    %290 = vmatprep.subr.mxu0 0.0
    %291 = vmatpush2.msra.mxu0 0.0
    %292 = vmatprep.subr.mxu0 0.0
    %293 = vmatpush2.msra.mxu0 0.0
    %294 = vmatprep.subr.mxu0 0.0
    %295 = vmatpush2.msra.mxu0 0.0
    %296 = vmatprep.subr.mxu0 0.0
    %297 = vmatpush2.msra.mxu0 0.0
    %298 = vmatprep.subr.mxu0 0.0
    %299 = vmatpush2.msra.mxu0 0.0
    %300 = vmatprep.subr.mxu0 0.0
    %301 = vmatpush2.msra.mxu0 0.0
    %302 = vmatprep.subr.mxu0 0.0
    %303 = vmatpush2.msra.mxu0 0.0
    %304 = vmatprep.subr.mxu0 0.0
    %305 = vmatpush2.msra.mxu0 0.0
    %306 = vmatprep.subr.mxu0 0.0
    %307 = vmatpush2.msra.mxu0 0.0
    %308 = vmatprep.subr.mxu0 0.0
    %309 = vmatpush2.msra.mxu0 0.0
    %310 = vmatprep.subr.mxu0 0.0
    %311 = vmatpush2.msra.mxu0 0.0
    %312 = vmatprep.subr.mxu0 0.0
    %313 = vmatpush2.msra.mxu0 0.0
    %314 = vmatprep.subr.mxu0 0.0
    %315 = vmatpush2.msra.mxu0 0.0
    %316 = vmatprep.subr.mxu0 0.0
    %317 = vmatpush2.msra.mxu0 0.0
    %318 = vmatprep.mubr.f32.mxu0 0.0
    %319 = vmatmul.mubr.f32.gmra.mxu0 %v252
    %v320 = vpop.f32.mrf.mxu0
    %v321 = vadd.f32 %v249, %v320
    %v322 = vpop.f32.mrf.mxu0
    %323 = vdwg.mxu0
    %v324 = vmax.f32 %v321, 0.0
    %v325 = vld [vmem:[#allocation5] sm:$0xff]
    %v326 = vld [vmem:[#allocation5 + $0x8] sm:$0xff]
    %v327 = vld [vmem:[#allocation5 + $0x10] sm:$0xff]
    %v328 = vld [vmem:[#allocation5 + $0x18] sm:$0xff]
    %v329 = vlaneseq
    %v330 = vshrl.u32 %v329, 7
    %v331 = vsub.s32 3, %v330
    %v332 = vrot.slane %v66, %v331
    %v334 = vsel %vm250, %v324, 0
    %336 = vmatprep.subr.mxu0 0.0
    %337 = vmatpush1.msra.mxu0 0.0
    %338 = vmatprep.subr.mxu0 0.0
    %339 = vmatpush1.msra.mxu0 0.0
    %340 = vmatprep.subr.mxu0 0.0
    %341 = vmatpush1.msra.mxu0 0.0
    %342 = vmatprep.subr.mxu0 0.0
    %343 = vmatpush1.msra.mxu0 0.0
    %344 = vmatprep.subr.mxu0 0.0
    %345 = vmatpush1.msra.mxu0 0.0
    %346 = vmatprep.subr.mxu0 0.0
    %347 = vmatpush1.msra.mxu0 0.0
    %348 = vmatprep.subr.mxu0 0.0
    %349 = vmatpush1.msra.mxu0 0.0
    %350 = vmatprep.subr.mxu0 0.0
    %351 = vmatpush1.msra.mxu0 0.0
    %352 = vmatprep.subr.mxu0 0.0
    %353 = vmatpush1.msra.mxu0 0.0
    %354 = vmatprep.subr.mxu0 0.0
    %355 = vmatpush1.msra.mxu0 0.0
    %356 = vmatprep.subr.mxu0 0.0
    %357 = vmatpush1.msra.mxu0 0.0
    %358 = vmatprep.subr.mxu0 0.0
    %359 = vmatpush1.msra.mxu0 0.0
    %360 = vmatprep.subr.mxu0 0.0
    %361 = vmatpush1.msra.mxu0 %v328
    %362 = vmatprep.subr.mxu0 0.0
    %363 = vmatpush1.msra.mxu0 %v327
    %364 = vmatprep.subr.mxu0 0.0
    %365 = vmatpush1.msra.mxu0 %v326
    %366 = vmatprep.subr.mxu0 0.0
    %367 = vmatpush1.msra.mxu0 %v325
    %368 = vmatprep.subr.mxu0 0.0
    %369 = vmatpush2.msra.mxu0 0.0
    %370 = vmatprep.subr.mxu0 0.0
    %371 = vmatpush2.msra.mxu0 0.0
    %372 = vmatprep.subr.mxu0 0.0
    %373 = vmatpush2.msra.mxu0 0.0
    %374 = vmatprep.subr.mxu0 0.0
    %375 = vmatpush2.msra.mxu0 0.0
    %376 = vmatprep.subr.mxu0 0.0
    %377 = vmatpush2.msra.mxu0 0.0
    %378 = vmatprep.subr.mxu0 0.0
    %379 = vmatpush2.msra.mxu0 0.0
    %380 = vmatprep.subr.mxu0 0.0
    %381 = vmatpush2.msra.mxu0 0.0
    %382 = vmatprep.subr.mxu0 0.0
    %383 = vmatpush2.msra.mxu0 0.0
    %384 = vmatprep.subr.mxu0 0.0
    %385 = vmatpush2.msra.mxu0 0.0
    %386 = vmatprep.subr.mxu0 0.0
    %387 = vmatpush2.msra.mxu0 0.0
    %388 = vmatprep.subr.mxu0 0.0
    %389 = vmatpush2.msra.mxu0 0.0
    %390 = vmatprep.subr.mxu0 0.0
    %391 = vmatpush2.msra.mxu0 0.0
    %392 = vmatprep.subr.mxu0 0.0
    %393 = vmatpush2.msra.mxu0 0.0
    %394 = vmatprep.subr.mxu0 0.0
    %395 = vmatpush2.msra.mxu0 0.0
    %396 = vmatprep.subr.mxu0 0.0
    %397 = vmatpush2.msra.mxu0 0.0
    %398 = vmatprep.subr.mxu0 0.0
    %399 = vmatpush2.msra.mxu0 0.0
    %400 = vmatprep.mubr.f32.mxu0 0.0
    %401 = vmatmul.mubr.f32.gmra.mxu0 %v334
    %v402 = vpop.f32.mrf.mxu0
    %v403 = vadd.f32 %v332, %v402
    %v404 = vpop.f32.mrf.mxu0
    %405 = vdwg.mxu0
    %v406 = vmax.f32 %v403, 0.0
    %v407 = vld [vmem:[%s5] sm:$0xff]
    %v408 = vld [vmem:[%s5 + $0x8] sm:$0xff]
    %v409 = vld [vmem:[%s5 + $0x10] sm:$0xff]
    %v410 = vld [vmem:[%s5 + $0x18] sm:$0xff]
    %v411 = vld [vmem:[%s5 + $0x20] sm:$0xff]
    %v412 = vld [vmem:[%s5 + $0x28] sm:$0xff]
    %v413 = vld [vmem:[%s5 + $0x30] sm:$0xff]
    %v414 = vld [vmem:[%s5 + $0x38] sm:$0xff]
    %v415 = vlaneseq
    %v416 = vshrl.u32 %v415, 7
    %v417 = vsub.s32 4, %v416
    %v418 = vrot.slane %v66, %v417
    %v420 = vsel %vm167, %v406, 0
    %422 = vmatprep.subr.mxu0 0.0
    %423 = vmatpush1.msra.mxu0 0.0
    %424 = vmatprep.subr.mxu0 0.0
    %425 = vmatpush1.msra.mxu0 0.0
    %426 = vmatprep.subr.mxu0 0.0
    %427 = vmatpush1.msra.mxu0 0.0
    %428 = vmatprep.subr.mxu0 0.0
    %429 = vmatpush1.msra.mxu0 0.0
    %430 = vmatprep.subr.mxu0 0.0
    %431 = vmatpush1.msra.mxu0 0.0
    %432 = vmatprep.subr.mxu0 0.0
    %433 = vmatpush1.msra.mxu0 0.0
    %434 = vmatprep.subr.mxu0 0.0
    %435 = vmatpush1.msra.mxu0 0.0
    %436 = vmatprep.subr.mxu0 0.0
    %437 = vmatpush1.msra.mxu0 0.0
    %438 = vmatprep.subr.mxu0 0.0
    %439 = vmatpush1.msra.mxu0 %v414
    %440 = vmatprep.subr.mxu0 0.0
    %441 = vmatpush1.msra.mxu0 %v413
    %442 = vmatprep.subr.mxu0 0.0
    %443 = vmatpush1.msra.mxu0 %v412
    %444 = vmatprep.subr.mxu0 0.0
    %445 = vmatpush1.msra.mxu0 %v411
    %446 = vmatprep.subr.mxu0 0.0
    %447 = vmatpush1.msra.mxu0 %v410
    %448 = vmatprep.subr.mxu0 0.0
    %449 = vmatpush1.msra.mxu0 %v409
    %450 = vmatprep.subr.mxu0 0.0
    %451 = vmatpush1.msra.mxu0 %v408
    %452 = vmatprep.subr.mxu0 0.0
    %453 = vmatpush1.msra.mxu0 %v407
    %454 = vmatprep.subr.mxu0 0.0
    %455 = vmatpush2.msra.mxu0 0.0
    %456 = vmatprep.subr.mxu0 0.0
    %457 = vmatpush2.msra.mxu0 0.0
    %458 = vmatprep.subr.mxu0 0.0
    %459 = vmatpush2.msra.mxu0 0.0
    %460 = vmatprep.subr.mxu0 0.0
    %461 = vmatpush2.msra.mxu0 0.0
    %462 = vmatprep.subr.mxu0 0.0
    %463 = vmatpush2.msra.mxu0 0.0
    %464 = vmatprep.subr.mxu0 0.0
    %465 = vmatpush2.msra.mxu0 0.0
    %466 = vmatprep.subr.mxu0 0.0
    %467 = vmatpush2.msra.mxu0 0.0
    %468 = vmatprep.subr.mxu0 0.0
    %469 = vmatpush2.msra.mxu0 0.0
    %470 = vmatprep.subr.mxu0 0.0
    %471 = vmatpush2.msra.mxu0 0.0
    %472 = vmatprep.subr.mxu0 0.0
    %473 = vmatpush2.msra.mxu0 0.0
    %474 = vmatprep.subr.mxu0 0.0
    %475 = vmatpush2.msra.mxu0 0.0
    %476 = vmatprep.subr.mxu0 0.0
    %477 = vmatpush2.msra.mxu0 0.0
    %478 = vmatprep.subr.mxu0 0.0
    %479 = vmatpush2.msra.mxu0 0.0
    %480 = vmatprep.subr.mxu0 0.0
    %481 = vmatpush2.msra.mxu0 0.0
    %482 = vmatprep.subr.mxu0 0.0
    %483 = vmatpush2.msra.mxu0 0.0
    %484 = vmatprep.subr.mxu0 0.0
    %485 = vmatpush2.msra.mxu0 0.0
    %486 = vmatprep.mubr.f32.mxu0 0.0
    %487 = vmatmul.mubr.f32.gmra.mxu0 %v420
    %v488 = vpop.f32.mrf.mxu0
    %v489 = vadd.f32 %v418, %v488
    %v490 = vpop.f32.mrf.mxu0
    %491 = vdwg.mxu0
    %492 = vst [vmem:[#allocation8] sm:$0xff] %v489
    // Predicated region
    $region42: #{tpu_custom_call.1} parent=1 // pred_check
      _
    $region43: #{tpu_custom_call.1} parent=1 // pred_check_branch
      %494 = sbr.rel (0) target = $region45
    $region44: #{tpu_custom_call.1} parent=1 // pred_region
      %s496 = ssub.s32 128, 128
      %497 = vsyncadd [#allocation4], %s496
      %s499 = sshll.u32 [#allocation8], 4
      %s500 = int_to_ptr.vmem [resolvable:$true] %s499
      %502 = dma.vmem_to_hbm [thread:$0]  %s500, 128, %s7, [#allocation4]
    $region45: #{tpu_custom_call.1} parent=1 // pred_fallthru
      _
    // Predicated region
    $region46: #{tpu_custom_call.1} parent=1 // pred_check
      _
    $region47: #{tpu_custom_call.1} parent=1 // pred_check_branch
      %504 = sbr.rel (0) target = $region49
    $region48: #{tpu_custom_call.1} parent=1 // pred_region
      %505 = dma.done [#allocation4], 128
    $region49: #{tpu_custom_call.1} parent=1 // pred_fallthru
      _
    %506 = vsyncpa [#allocation3], 1
    %507 = vsyncpa [#allocation6], 1
    %508 = vsyncpa [#allocation4], 1

// kernel: tpu_custom_call.1
$region0: #{tpu_custom_call.1}
  #allocation0 [shape = 'u32[]', space=smem, size = 0x4, offset = 0x4, fixed_abs, tag = 'smem constant byte address 0x4 - core index']
  #allocation1 [shape = 'u32[144,128]{1,0:T(1,128)}', space=vmem, size = 0x12000, scoped, tag = 'internal scratch']
  %s0 = inlined_call_operand.vmem [shape: f32[8,30], index: 0, kind: input, shape index: {}]
  %s1 = inlined_call_operand.vmem [shape: f32[30,64], index: 1, kind: input, shape index: {}]
  %s2 = inlined_call_operand.vmem [shape: f32[64,32], index: 2, kind: input, shape index: {}]
  %s3 = inlined_call_operand.hbm [shape: f32[32,32], index: 3, kind: input, shape index: {}]
  %s4 = inlined_call_operand.hbm [shape: f32[32,64], index: 4, kind: input, shape index: {}]
  %s5 = inlined_call_operand.vmem [shape: f32[64,128], index: 5, kind: input, shape index: {}]
  %s6 = inlined_call_operand.hbm [shape: f32[8,128], index: 6, kind: input, shape index: {}]
  %s7 = inlined_call_operand.hbm [shape: f32[8,128], index: 7, kind: output, shape index: {}]
  %s8 = sld [smem:[#allocation0]]
  $region50: #{tpu_custom_call.1} parent=0
    _
  %s10 = ssub.s32 1, %s8
  %s11 = scalar_select 0, %s10, %s8
  $region1: #{tpu_custom_call.1} parent=0
    #allocation2 [shape = 'u8[16384]{0}', space=vmem, size = 0x4000, scoped, tag = 'input window, operand 3, single buffered']
    #allocation3 [shape = 's32[1]{0}', space=sflag, size = 0x4, scoped, tag = 'scoped memory for tpu_custom_call.1']
    #allocation4 [shape = 's32[1]{0}', space=sflag, size = 0x4, scoped, tag = 'scoped memory for tpu_custom_call.1']
    #allocation5 [shape = 'u8[16384]{0}', space=vmem, size = 0x4000, scoped, tag = 'input window, operand 4, single buffered']
    #allocation6 [shape = 's32[1]{0}', space=sflag, size = 0x4, scoped, tag = 'scoped memory for tpu_custom_call.1']
    #allocation7 [shape = 'u8[4096]{0}', space=vmem, size = 0x1000, scoped, tag = 'input window, operand 6, single buffered']
    #allocation8 [shape = 'u8[4096]{0}', space=vmem, size = 0x1000, scoped, tag = 'output window, operand 0, single buffered']
    %12 = vsyncpa [#allocation3], 0
    %13 = vsyncpa [#allocation6], 0
    %14 = vsyncpa [#allocation4], 0
    // Predicated region
    $region2: #{tpu_custom_call.1} parent=1 // pred_check
      _
    $region3: #{tpu_custom_call.1} parent=1 // pred_check_branch
      %16 = sbr.rel (0) target = $region5
    $region4: #{tpu_custom_call.1} parent=1 // pred_region
      _
    $region5: #{tpu_custom_call.1} parent=1 // pred_fallthru
      _
    // Predicated region
    $region6: #{tpu_custom_call.1} parent=1 // pred_check
      _
    $region7: #{tpu_custom_call.1} parent=1 // pred_check_branch
      %18 = sbr.rel (0) target = $region9
    $region8: #{tpu_custom_call.1} parent=1 // pred_region
      _
    $region9: #{tpu_custom_call.1} parent=1 // pred_fallthru
      _
    // Predicated region
    $region10: #{tpu_custom_call.1} parent=1 // pred_check
      _
    $region11: #{tpu_custom_call.1} parent=1 // pred_check_branch
      %20 = sbr.rel (0) target = $region13
    $region12: #{tpu_custom_call.1} parent=1 // pred_region
      _
    $region13: #{tpu_custom_call.1} parent=1 // pred_fallthru
      _
    // Predicated region
    $region14: #{tpu_custom_call.1} parent=1 // pred_check
      _
    $region15: #{tpu_custom_call.1} parent=1 // pred_check_branch
      %22 = sbr.rel (0) target = $region17
    $region16: #{tpu_custom_call.1} parent=1 // pred_region
      %s24 = ssub.s32 512, 512
      %25 = vsyncadd [#allocation3], %s24
      %s26 = sshll.u32 [#allocation2], 4
      %s27 = int_to_ptr.vmem [resolvable:$true] %s26
      %32 = dma.hbm_to_vmem [thread:$0]  %s3, 512, %s27, [#allocation3], 128, 128, 8
    $region17: #{tpu_custom_call.1} parent=1 // pred_fallthru
      _
    // Predicated region
    $region18: #{tpu_custom_call.1} parent=1 // pred_check
      _
    $region19: #{tpu_custom_call.1} parent=1 // pred_check_branch
      %34 = sbr.rel (0) target = $region21
    $region20: #{tpu_custom_call.1} parent=1 // pred_region
      %s36 = ssub.s32 512, 512
      %37 = vsyncadd [#allocation6], %s36
      %s38 = sshll.u32 [#allocation5], 4
      %s39 = int_to_ptr.vmem [resolvable:$true] %s38
      %44 = dma.hbm_to_vmem [thread:$0]  %s4, 512, %s39, [#allocation6], 128, 128, 8
    $region21: #{tpu_custom_call.1} parent=1 // pred_fallthru
      _
    // Predicated region
    $region22: #{tpu_custom_call.1} parent=1 // pred_check
      _
    $region23: #{tpu_custom_call.1} parent=1 // pred_check_branch
      %46 = sbr.rel (0) target = $region25
    $region24: #{tpu_custom_call.1} parent=1 // pred_region
      _
    $region25: #{tpu_custom_call.1} parent=1 // pred_fallthru
      _
    // Predicated region
    $region26: #{tpu_custom_call.1} parent=1 // pred_check
      _
    $region27: #{tpu_custom_call.1} parent=1 // pred_check_branch
      %48 = sbr.rel (0) target = $region29
    $region28: #{tpu_custom_call.1} parent=1 // pred_region
      %s50 = ssub.s32 128, 128
      %51 = vsyncadd [#allocation6], %s50
      %s53 = sshll.u32 [#allocation7], 4
      %s54 = int_to_ptr.vmem [resolvable:$true] %s53
      %56 = dma.hbm_to_vmem [thread:$0]  %s6, 128, %s54, [#allocation6]
    $region29: #{tpu_custom_call.1} parent=1 // pred_fallthru
      _
    // Predicated region
    $region30: #{tpu_custom_call.1} parent=1 // pred_check
      _
    $region31: #{tpu_custom_call.1} parent=1 // pred_check_branch
      %58 = sbr.rel (0) target = $region33
    $region32: #{tpu_custom_call.1} parent=1 // pred_region
      %59 = dma.done [#allocation3], 512
    $region33: #{tpu_custom_call.1} parent=1 // pred_fallthru
      _
    // Predicated region
    $region34: #{tpu_custom_call.1} parent=1 // pred_check
      _
    $region35: #{tpu_custom_call.1} parent=1 // pred_check_branch
      %61 = sbr.rel (0) target = $region37
    $region36: #{tpu_custom_call.1} parent=1 // pred_region
      %62 = dma.done [#allocation6], 512
    $region37: #{tpu_custom_call.1} parent=1 // pred_fallthru
      _
    // Predicated region
    $region38: #{tpu_custom_call.1} parent=1 // pred_check
      _
    $region39: #{tpu_custom_call.1} parent=1 // pred_check_branch
      %64 = sbr.rel (0) target = $region41
    $region40: #{tpu_custom_call.1} parent=1 // pred_region
      %65 = dma.done [#allocation6], 128
    $region41: #{tpu_custom_call.1} parent=1 // pred_fallthru
      _
    %v66 = vld [vmem:[#allocation7] sm:$0xff]
    %v67 = vld [vmem:[%s0] sm:$0xff]
    %v68 = vld [vmem:[%s1] sm:$0xff]
    %v69 = vld [vmem:[%s1 + $0x8] sm:$0xff]
    %v70 = vld [vmem:[%s1 + $0x10] sm:$0xff]
    %v71 = vld [vmem:[%s1 + $0x18] sm:$0x3f]
    %v72 = vlaneseq
    %v73 = vshrl.u32 %v72, 7
    %v74 = vsub.s32 0, %v73
    %v75 = vrot.slane %v66, %v74
    %vm76 = vcmask 244736
    %v78 = vsel %vm76, %v67, 0
    %vm80 = vcmask 1045504
    %v82 = vsel %vm80, %v71, 0
    %84 = vmatprep.subr.mxu0 0.0
    %85 = vmatpush1.msra.mxu0 0.0
    %86 = vmatprep.subr.mxu0 0.0
    %87 = vmatpush1.msra.mxu0 0.0
    %88 = vmatprep.subr.mxu0 0.0
    %89 = vmatpush1.msra.mxu0 0.0
    %90 = vmatprep.subr.mxu0 0.0
    %91 = vmatpush1.msra.mxu0 0.0
    %92 = vmatprep.subr.mxu0 0.0
    %93 = vmatpush1.msra.mxu0 0.0
    %94 = vmatprep.subr.mxu0 0.0
    %95 = vmatpush1.msra.mxu0 0.0
    %96 = vmatprep.subr.mxu0 0.0
    %97 = vmatpush1.msra.mxu0 0.0
    %98 = vmatprep.subr.mxu0 0.0
    %99 = vmatpush1.msra.mxu0 0.0
    %100 = vmatprep.subr.mxu0 0.0
    %101 = vmatpush1.msra.mxu0 0.0
    %102 = vmatprep.subr.mxu0 0.0
    %103 = vmatpush1.msra.mxu0 0.0
    %104 = vmatprep.subr.mxu0 0.0
    %105 = vmatpush1.msra.mxu0 0.0
    %106 = vmatprep.subr.mxu0 0.0
    %107 = vmatpush1.msra.mxu0 0.0
    %108 = vmatprep.subr.mxu0 0.0
    %109 = vmatpush1.msra.mxu0 %v82
    %110 = vmatprep.subr.mxu0 0.0
    %111 = vmatpush1.msra.mxu0 %v70
    %112 = vmatprep.subr.mxu0 0.0
    %113 = vmatpush1.msra.mxu0 %v69
    %114 = vmatprep.subr.mxu0 0.0
    %115 = vmatpush1.msra.mxu0 %v68
    %116 = vmatprep.subr.mxu0 0.0
    %117 = vmatpush2.msra.mxu0 0.0
    %118 = vmatprep.subr.mxu0 0.0
    %119 = vmatpush2.msra.mxu0 0.0
    %120 = vmatprep.subr.mxu0 0.0
    %121 = vmatpush2.msra.mxu0 0.0
    %122 = vmatprep.subr.mxu0 0.0
    %123 = vmatpush2.msra.mxu0 0.0
    %124 = vmatprep.subr.mxu0 0.0
    %125 = vmatpush2.msra.mxu0 0.0
    %126 = vmatprep.subr.mxu0 0.0
    %127 = vmatpush2.msra.mxu0 0.0
    %128 = vmatprep.subr.mxu0 0.0
    %129 = vmatpush2.msra.mxu0 0.0
    %130 = vmatprep.subr.mxu0 0.0
    %131 = vmatpush2.msra.mxu0 0.0
    %132 = vmatprep.subr.mxu0 0.0
    %133 = vmatpush2.msra.mxu0 0.0
    %134 = vmatprep.subr.mxu0 0.0
    %135 = vmatpush2.msra.mxu0 0.0
    %136 = vmatprep.subr.mxu0 0.0
    %137 = vmatpush2.msra.mxu0 0.0
    %138 = vmatprep.subr.mxu0 0.0
    %139 = vmatpush2.msra.mxu0 0.0
    %140 = vmatprep.subr.mxu0 0.0
    %141 = vmatpush2.msra.mxu0 0.0
    %142 = vmatprep.subr.mxu0 0.0
    %143 = vmatpush2.msra.mxu0 0.0
    %144 = vmatprep.subr.mxu0 0.0
    %145 = vmatpush2.msra.mxu0 0.0
    %146 = vmatprep.subr.mxu0 0.0
    %147 = vmatpush2.msra.mxu0 0.0
    %148 = vmatprep.mubr.f32.mxu0 0.0
    %149 = vmatmul.mubr.f32.gmra.mxu0 %v78
    %v150 = vpop.f32.mrf.mxu0
    %v151 = vadd.f32 %v75, %v150
    %v152 = vpop.f32.mrf.mxu0
    %153 = vdwg.mxu0
    %v154 = vmax.f32 %v151, 0.0
    %v155 = vld [vmem:[%s2] sm:$0xff]
    %v156 = vld [vmem:[%s2 + $0x8] sm:$0xff]
    %v157 = vld [vmem:[%s2 + $0x10] sm:$0xff]
    %v158 = vld [vmem:[%s2 + $0x18] sm:$0xff]
    %v159 = vld [vmem:[%s2 + $0x20] sm:$0xff]
    %v160 = vld [vmem:[%s2 + $0x28] sm:$0xff]
    %v161 = vld [vmem:[%s2 + $0x30] sm:$0xff]
    %v162 = vld [vmem:[%s2 + $0x38] sm:$0xff]
    %v163 = vlaneseq
    %v164 = vshrl.u32 %v163, 7
    %v165 = vsub.s32 1, %v164
    %v166 = vrot.slane %v66, %v165
    %vm167 = vcmask 523264
    %v169 = vsel %vm167, %v154, 0
    %171 = vmatprep.subr.mxu0 0.0
    %172 = vmatpush1.msra.mxu0 0.0
    %173 = vmatprep.subr.mxu0 0.0
    %174 = vmatpush1.msra.mxu0 0.0
    %175 = vmatprep.subr.mxu0 0.0
    %176 = vmatpush1.msra.mxu0 0.0
    %177 = vmatprep.subr.mxu0 0.0
    %178 = vmatpush1.msra.mxu0 0.0
    %179 = vmatprep.subr.mxu0 0.0
    %180 = vmatpush1.msra.mxu0 0.0
    %181 = vmatprep.subr.mxu0 0.0
    %182 = vmatpush1.msra.mxu0 0.0
    %183 = vmatprep.subr.mxu0 0.0
    %184 = vmatpush1.msra.mxu0 0.0
    %185 = vmatprep.subr.mxu0 0.0
    %186 = vmatpush1.msra.mxu0 0.0
    %187 = vmatprep.subr.mxu0 0.0
    %188 = vmatpush1.msra.mxu0 %v162
    %189 = vmatprep.subr.mxu0 0.0
    %190 = vmatpush1.msra.mxu0 %v161
    %191 = vmatprep.subr.mxu0 0.0
    %192 = vmatpush1.msra.mxu0 %v160
    %193 = vmatprep.subr.mxu0 0.0
    %194 = vmatpush1.msra.mxu0 %v159
    %195 = vmatprep.subr.mxu0 0.0
    %196 = vmatpush1.msra.mxu0 %v158
    %197 = vmatprep.subr.mxu0 0.0
    %198 = vmatpush1.msra.mxu0 %v157
    %199 = vmatprep.subr.mxu0 0.0
    %200 = vmatpush1.msra.mxu0 %v156
    %201 = vmatprep.subr.mxu0 0.0
    %202 = vmatpush1.msra.mxu0 %v155
    %203 = vmatprep.subr.mxu0 0.0
    %204 = vmatpush2.msra.mxu0 0.0
    %205 = vmatprep.subr.mxu0 0.0
    %206 = vmatpush2.msra.mxu0 0.0
    %207 = vmatprep.subr.mxu0 0.0
    %208 = vmatpush2.msra.mxu0 0.0
    %209 = vmatprep.subr.mxu0 0.0
    %210 = vmatpush2.msra.mxu0 0.0
    %211 = vmatprep.subr.mxu0 0.0
    %212 = vmatpush2.msra.mxu0 0.0
    %213 = vmatprep.subr.mxu0 0.0
    %214 = vmatpush2.msra.mxu0 0.0
    %215 = vmatprep.subr.mxu0 0.0
    %216 = vmatpush2.msra.mxu0 0.0
    %217 = vmatprep.subr.mxu0 0.0
    %218 = vmatpush2.msra.mxu0 0.0
    %219 = vmatprep.subr.mxu0 0.0
    %220 = vmatpush2.msra.mxu0 0.0
    %221 = vmatprep.subr.mxu0 0.0
    %222 = vmatpush2.msra.mxu0 0.0
    %223 = vmatprep.subr.mxu0 0.0
    %224 = vmatpush2.msra.mxu0 0.0
    %225 = vmatprep.subr.mxu0 0.0
    %226 = vmatpush2.msra.mxu0 0.0
    %227 = vmatprep.subr.mxu0 0.0
    %228 = vmatpush2.msra.mxu0 0.0
    %229 = vmatprep.subr.mxu0 0.0
    %230 = vmatpush2.msra.mxu0 0.0
    %231 = vmatprep.subr.mxu0 0.0
    %232 = vmatpush2.msra.mxu0 0.0
    %233 = vmatprep.subr.mxu0 0.0
    %234 = vmatpush2.msra.mxu0 0.0
    %235 = vmatprep.mubr.f32.mxu0 0.0
    %236 = vmatmul.mubr.f32.gmra.mxu0 %v169
    %v237 = vpop.f32.mrf.mxu0
    %v238 = vadd.f32 %v166, %v237
    %v239 = vpop.f32.mrf.mxu0
    %240 = vdwg.mxu0
    %v241 = vmax.f32 %v238, 0.0
    %v242 = vld [vmem:[#allocation2] sm:$0xff]
    %v243 = vld [vmem:[#allocation2 + $0x8] sm:$0xff]
    %v244 = vld [vmem:[#allocation2 + $0x10] sm:$0xff]
    %v245 = vld [vmem:[#allocation2 + $0x18] sm:$0xff]
    %v246 = vlaneseq
    %v247 = vshrl.u32 %v246, 7
    %v248 = vsub.s32 2, %v247
    %v249 = vrot.slane %v66, %v248
    %vm250 = vcmask 261120
    %v252 = vsel %vm250, %v241, 0
    %254 = vmatprep.subr.mxu0 0.0
    %255 = vmatpush1.msra.mxu0 0.0
    %256 = vmatprep.subr.mxu0 0.0
    %257 = vmatpush1.msra.mxu0 0.0
    %258 = vmatprep.subr.mxu0 0.0
    %259 = vmatpush1.msra.mxu0 0.0
    %260 = vmatprep.subr.mxu0 0.0
    %261 = vmatpush1.msra.mxu0 0.0
    %262 = vmatprep.subr.mxu0 0.0
    %263 = vmatpush1.msra.mxu0 0.0
    %264 = vmatprep.subr.mxu0 0.0
    %265 = vmatpush1.msra.mxu0 0.0
    %266 = vmatprep.subr.mxu0 0.0
    %267 = vmatpush1.msra.mxu0 0.0
    %268 = vmatprep.subr.mxu0 0.0
    %269 = vmatpush1.msra.mxu0 0.0
    %270 = vmatprep.subr.mxu0 0.0
    %271 = vmatpush1.msra.mxu0 0.0
    %272 = vmatprep.subr.mxu0 0.0
    %273 = vmatpush1.msra.mxu0 0.0
    %274 = vmatprep.subr.mxu0 0.0
    %275 = vmatpush1.msra.mxu0 0.0
    %276 = vmatprep.subr.mxu0 0.0
    %277 = vmatpush1.msra.mxu0 0.0
    %278 = vmatprep.subr.mxu0 0.0
    %279 = vmatpush1.msra.mxu0 %v245
    %280 = vmatprep.subr.mxu0 0.0
    %281 = vmatpush1.msra.mxu0 %v244
    %282 = vmatprep.subr.mxu0 0.0
    %283 = vmatpush1.msra.mxu0 %v243
    %284 = vmatprep.subr.mxu0 0.0
    %285 = vmatpush1.msra.mxu0 %v242
    %286 = vmatprep.subr.mxu0 0.0
    %287 = vmatpush2.msra.mxu0 0.0
    %288 = vmatprep.subr.mxu0 0.0
    %289 = vmatpush2.msra.mxu0 0.0
    %290 = vmatprep.subr.mxu0 0.0
    %291 = vmatpush2.msra.mxu0 0.0
    %292 = vmatprep.subr.mxu0 0.0
    %293 = vmatpush2.msra.mxu0 0.0
    %294 = vmatprep.subr.mxu0 0.0
    %295 = vmatpush2.msra.mxu0 0.0
    %296 = vmatprep.subr.mxu0 0.0
    %297 = vmatpush2.msra.mxu0 0.0
    %298 = vmatprep.subr.mxu0 0.0
    %299 = vmatpush2.msra.mxu0 0.0
    %300 = vmatprep.subr.mxu0 0.0
    %301 = vmatpush2.msra.mxu0 0.0
    %302 = vmatprep.subr.mxu0 0.0
    %303 = vmatpush2.msra.mxu0 0.0
    %304 = vmatprep.subr.mxu0 0.0
    %305 = vmatpush2.msra.mxu0 0.0
    %306 = vmatprep.subr.mxu0 0.0
    %307 = vmatpush2.msra.mxu0 0.0
    %308 = vmatprep.subr.mxu0 0.0
    %309 = vmatpush2.msra.mxu0 0.0
    %310 = vmatprep.subr.mxu0 0.0
    %311 = vmatpush2.msra.mxu0 0.0
    %312 = vmatprep.subr.mxu0 0.0
    %313 = vmatpush2.msra.mxu0 0.0
    %314 = vmatprep.subr.mxu0 0.0
    %315 = vmatpush2.msra.mxu0 0.0
    %316 = vmatprep.subr.mxu0 0.0
    %317 = vmatpush2.msra.mxu0 0.0
    %318 = vmatprep.mubr.f32.mxu0 0.0
    %319 = vmatmul.mubr.f32.gmra.mxu0 %v252
    %v320 = vpop.f32.mrf.mxu0
    %v321 = vadd.f32 %v249, %v320
    %v322 = vpop.f32.mrf.mxu0
    %323 = vdwg.mxu0
    %v324 = vmax.f32 %v321, 0.0
    %v325 = vld [vmem:[#allocation5] sm:$0xff]
    %v326 = vld [vmem:[#allocation5 + $0x8] sm:$0xff]
    %v327 = vld [vmem:[#allocation5 + $0x10] sm:$0xff]
    %v328 = vld [vmem:[#allocation5 + $0x18] sm:$0xff]
    %v329 = vlaneseq
    %v330 = vshrl.u32 %v329, 7
    %v331 = vsub.s32 3, %v330
    %v332 = vrot.slane %v66, %v331
    %v334 = vsel %vm250, %v324, 0
    %336 = vmatprep.subr.mxu0 0.0
    %337 = vmatpush1.msra.mxu0 0.0
    %338 = vmatprep.subr.mxu0 0.0
    %339 = vmatpush1.msra.mxu0 0.0
    %340 = vmatprep.subr.mxu0 0.0
    %341 = vmatpush1.msra.mxu0 0.0
    %342 = vmatprep.subr.mxu0 0.0
    %343 = vmatpush1.msra.mxu0 0.0
    %344 = vmatprep.subr.mxu0 0.0
    %345 = vmatpush1.msra.mxu0 0.0
    %346 = vmatprep.subr.mxu0 0.0
    %347 = vmatpush1.msra.mxu0 0.0
    %348 = vmatprep.subr.mxu0 0.0
    %349 = vmatpush1.msra.mxu0 0.0
    %350 = vmatprep.subr.mxu0 0.0
    %351 = vmatpush1.msra.mxu0 0.0
    %352 = vmatprep.subr.mxu0 0.0
    %353 = vmatpush1.msra.mxu0 0.0
    %354 = vmatprep.subr.mxu0 0.0
    %355 = vmatpush1.msra.mxu0 0.0
    %356 = vmatprep.subr.mxu0 0.0
    %357 = vmatpush1.msra.mxu0 0.0
    %358 = vmatprep.subr.mxu0 0.0
    %359 = vmatpush1.msra.mxu0 0.0
    %360 = vmatprep.subr.mxu0 0.0
    %361 = vmatpush1.msra.mxu0 %v328
    %362 = vmatprep.subr.mxu0 0.0
    %363 = vmatpush1.msra.mxu0 %v327
    %364 = vmatprep.subr.mxu0 0.0
    %365 = vmatpush1.msra.mxu0 %v326
    %366 = vmatprep.subr.mxu0 0.0
    %367 = vmatpush1.msra.mxu0 %v325
    %368 = vmatprep.subr.mxu0 0.0
    %369 = vmatpush2.msra.mxu0 0.0
    %370 = vmatprep.subr.mxu0 0.0
    %371 = vmatpush2.msra.mxu0 0.0
    %372 = vmatprep.subr.mxu0 0.0
    %373 = vmatpush2.msra.mxu0 0.0
    %374 = vmatprep.subr.mxu0 0.0
    %375 = vmatpush2.msra.mxu0 0.0
    %376 = vmatprep.subr.mxu0 0.0
    %377 = vmatpush2.msra.mxu0 0.0
    %378 = vmatprep.subr.mxu0 0.0
    %379 = vmatpush2.msra.mxu0 0.0
    %380 = vmatprep.subr.mxu0 0.0
    %381 = vmatpush2.msra.mxu0 0.0
    %382 = vmatprep.subr.mxu0 0.0
    %383 = vmatpush2.msra.mxu0 0.0
    %384 = vmatprep.subr.mxu0 0.0
    %385 = vmatpush2.msra.mxu0 0.0
    %386 = vmatprep.subr.mxu0 0.0
    %387 = vmatpush2.msra.mxu0 0.0
    %388 = vmatprep.subr.mxu0 0.0
    %389 = vmatpush2.msra.mxu0 0.0
    %390 = vmatprep.subr.mxu0 0.0
    %391 = vmatpush2.msra.mxu0 0.0
    %392 = vmatprep.subr.mxu0 0.0
    %393 = vmatpush2.msra.mxu0 0.0
    %394 = vmatprep.subr.mxu0 0.0
    %395 = vmatpush2.msra.mxu0 0.0
    %396 = vmatprep.subr.mxu0 0.0
    %397 = vmatpush2.msra.mxu0 0.0
    %398 = vmatprep.subr.mxu0 0.0
    %399 = vmatpush2.msra.mxu0 0.0
    %400 = vmatprep.mubr.f32.mxu0 0.0
    %401 = vmatmul.mubr.f32.gmra.mxu0 %v334
    %v402 = vpop.f32.mrf.mxu0
    %v403 = vadd.f32 %v332, %v402
    %v404 = vpop.f32.mrf.mxu0
    %405 = vdwg.mxu0
    %v406 = vmax.f32 %v403, 0.0
    %v407 = vld [vmem:[%s5] sm:$0xff]
    %v408 = vld [vmem:[%s5 + $0x8] sm:$0xff]
    %v409 = vld [vmem:[%s5 + $0x10] sm:$0xff]
    %v410 = vld [vmem:[%s5 + $0x18] sm:$0xff]
    %v411 = vld [vmem:[%s5 + $0x20] sm:$0xff]
    %v412 = vld [vmem:[%s5 + $0x28] sm:$0xff]
    %v413 = vld [vmem:[%s5 + $0x30] sm:$0xff]
    %v414 = vld [vmem:[%s5 + $0x38] sm:$0xff]
    %v415 = vlaneseq
    %v416 = vshrl.u32 %v415, 7
    %v417 = vsub.s32 4, %v416
    %v418 = vrot.slane %v66, %v417
    %v420 = vsel %vm167, %v406, 0
    %422 = vmatprep.subr.mxu0 0.0
    %423 = vmatpush1.msra.mxu0 0.0
    %424 = vmatprep.subr.mxu0 0.0
    %425 = vmatpush1.msra.mxu0 0.0
    %426 = vmatprep.subr.mxu0 0.0
    %427 = vmatpush1.msra.mxu0 0.0
    %428 = vmatprep.subr.mxu0 0.0
    %429 = vmatpush1.msra.mxu0 0.0
    %430 = vmatprep.subr.mxu0 0.0
    %431 = vmatpush1.msra.mxu0 0.0
    %432 = vmatprep.subr.mxu0 0.0
    %433 = vmatpush1.msra.mxu0 0.0
    %434 = vmatprep.subr.mxu0 0.0
    %435 = vmatpush1.msra.mxu0 0.0
    %436 = vmatprep.subr.mxu0 0.0
    %437 = vmatpush1.msra.mxu0 0.0
    %438 = vmatprep.subr.mxu0 0.0
    %439 = vmatpush1.msra.mxu0 %v414
    %440 = vmatprep.subr.mxu0 0.0
    %441 = vmatpush1.msra.mxu0 %v413
    %442 = vmatprep.subr.mxu0 0.0
    %443 = vmatpush1.msra.mxu0 %v412
    %444 = vmatprep.subr.mxu0 0.0
    %445 = vmatpush1.msra.mxu0 %v411
    %446 = vmatprep.subr.mxu0 0.0
    %447 = vmatpush1.msra.mxu0 %v410
    %448 = vmatprep.subr.mxu0 0.0
    %449 = vmatpush1.msra.mxu0 %v409
    %450 = vmatprep.subr.mxu0 0.0
    %451 = vmatpush1.msra.mxu0 %v408
    %452 = vmatprep.subr.mxu0 0.0
    %453 = vmatpush1.msra.mxu0 %v407
    %454 = vmatprep.subr.mxu0 0.0
    %455 = vmatpush2.msra.mxu0 0.0
    %456 = vmatprep.subr.mxu0 0.0
    %457 = vmatpush2.msra.mxu0 0.0
    %458 = vmatprep.subr.mxu0 0.0
    %459 = vmatpush2.msra.mxu0 0.0
    %460 = vmatprep.subr.mxu0 0.0
    %461 = vmatpush2.msra.mxu0 0.0
    %462 = vmatprep.subr.mxu0 0.0
    %463 = vmatpush2.msra.mxu0 0.0
    %464 = vmatprep.subr.mxu0 0.0
    %465 = vmatpush2.msra.mxu0 0.0
    %466 = vmatprep.subr.mxu0 0.0
    %467 = vmatpush2.msra.mxu0 0.0
    %468 = vmatprep.subr.mxu0 0.0
    %469 = vmatpush2.msra.mxu0 0.0
    %470 = vmatprep.subr.mxu0 0.0
    %471 = vmatpush2.msra.mxu0 0.0
    %472 = vmatprep.subr.mxu0 0.0
    %473 = vmatpush2.msra.mxu0 0.0
    %474 = vmatprep.subr.mxu0 0.0
    %475 = vmatpush2.msra.mxu0 0.0
    %476 = vmatprep.subr.mxu0 0.0
    %477 = vmatpush2.msra.mxu0 0.0
    %478 = vmatprep.subr.mxu0 0.0
    %479 = vmatpush2.msra.mxu0 0.0
    %480 = vmatprep.subr.mxu0 0.0
    %481 = vmatpush2.msra.mxu0 0.0
    %482 = vmatprep.subr.mxu0 0.0
    %483 = vmatpush2.msra.mxu0 0.0
    %484 = vmatprep.subr.mxu0 0.0
    %485 = vmatpush2.msra.mxu0 0.0
    %486 = vmatprep.mubr.f32.mxu0 0.0
    %487 = vmatmul.mubr.f32.gmra.mxu0 %v420
    %v488 = vpop.f32.mrf.mxu0
    %v489 = vadd.f32 %v418, %v488
    %v490 = vpop.f32.mrf.mxu0
    %491 = vdwg.mxu0
    %492 = vst [vmem:[#allocation8] sm:$0xff] %v489
    // Predicated region
    $region42: #{tpu_custom_call.1} parent=1 // pred_check
      _
    $region43: #{tpu_custom_call.1} parent=1 // pred_check_branch
      %494 = sbr.rel (0) target = $region45
    $region44: #{tpu_custom_call.1} parent=1 // pred_region
      %s496 = ssub.s32 128, 128
      %497 = vsyncadd [#allocation4], %s496
      %s499 = sshll.u32 [#allocation8], 4
      %s500 = int_to_ptr.vmem [resolvable:$true] %s499
      %502 = dma.vmem_to_hbm [thread:$0]  %s500, 128, %s7, [#allocation4]
    $region45: #{tpu_custom_call.1} parent=1 // pred_fallthru
      _
    // Predicated region
    $region46: #{tpu_custom_call.1} parent=1 // pred_check
      _
    $region47: #{tpu_custom_call.1} parent=1 // pred_check_branch
      %504 = sbr.rel (0) target = $region49
    $region48: #{tpu_custom_call.1} parent=1 // pred_region
      %505 = dma.done [#allocation4], 128
    $region49: #{tpu_custom_call.1} parent=1 // pred_fallthru
      _
    %506 = vsyncpa [#allocation3], 1
    %507 = vsyncpa [#allocation6], 1
    %508 = vsyncpa [#allocation4], 1

</llo_original>
